<compile_context>
chip_gen: v7x
topology: tpu7x:2x2x1
jax: 0.10.0
libtpu: 0.0.40
codegen_flags: <defaults>
</compile_context>

<pallas_src>
import functools

import jax
import jax.numpy as jnp
from jax.experimental import pallas as pl
from jax.experimental.pallas import tpu as pltpu


def _focal_loss_kernel(logits_ref, targets_ref, out_ref, *,
                       alpha, gamma, ignore_index, n_batch, spatial,
                       bn, tile_s, sub, n_sub, s_inner,
                       mask_batch, mask_spatial):
    nb = pl.program_id(0)
    p = pl.program_id(1)
    s = pl.program_id(2)

    # The output block is the VMEM-resident accumulator for this (nb, p) chunk;
    # init on the first inner-spatial step, auto-writeback when the (nb, p)
    # block index changes (spatial reduction axis is last in the grid).
    @pl.when(s == 0)
    def _():
        out_ref[...] = jnp.zeros_like(out_ref)

    # Global lane offset of this (p, s) spatial tile (unclamped: lanes past the
    # real spatial extent -- ragged last tile or a clamped duplicate tile --
    # are masked below).
    tile_start = (p * s_inner + s) * tile_s

    def do_row(r):
        row_ok = None
        if mask_batch:
            row_ok = (nb * bn + r) < n_batch
        # Static lane sub-chunks: zero-cost slicing, keeps the live vreg set to
        # a few vregs per (1, C, SUB) temporary while the DMA block feeding
        # this invocation stays large.
        for c in range(n_sub):
            sl = pl.ds(c * sub, sub)                                  # static
            lg = logits_ref[pl.ds(r, 1), :, sl].astype(jnp.float32)   # (1,C,SUB)
            tg = targets_ref[pl.ds(r, 1), :, sl]                      # (1,1,SUB)

            # Class axis sits on sublanes -> all reductions over axis=1.
            m = jnp.max(lg, axis=1, keepdims=True)                    # (1,1,SUB)
            e = jnp.exp(lg - m)
            sum_e = jnp.sum(e, axis=1, keepdims=True)
            lse = m + jnp.log(sum_e)

            cls = jax.lax.broadcasted_iota(jnp.int32, lg.shape, 1)
            tgt_logit = jnp.sum(jnp.where(cls == tg, lg, 0.0),
                                axis=1, keepdims=True)
            ce = lse - tgt_logit                                      # (1,1,SUB)

            # Focal modulation. gamma/alpha are static Python constants, so the
            # gamma in {0,1,2} and alpha == 1 cases compile to no extra work.
            if gamma == 0.0:
                focal = ce
            else:
                # pt = exp(-ce), exact (single EUP op), no approx reciprocal.
                pt = jnp.exp(tgt_logit - lse)
                omp = jnp.maximum(1.0 - pt, 0.0)   # clamp fp noise before pow
                if gamma == 1.0:
                    w = omp
                elif gamma == 2.0:
                    w = omp * omp
                else:
                    w = jnp.power(omp, gamma)
                focal = w * ce
            if alpha != 1.0:
                focal = alpha * focal

            # Validity mask: ignore_index labels, lanes past the real spatial
            # extent and rows past the real batch extent (ragged edge blocks /
            # clamped duplicate tiles).  The select also drops NaN/Inf coming
            # from out-of-bounds garbage lanes.
            valid = tg != ignore_index
            if mask_spatial:
                lane = jax.lax.broadcasted_iota(jnp.int32, tg.shape, 2)
                valid &= (tile_start + c * sub + lane) < spatial
            if mask_batch:
                valid &= row_ok
            focal = jnp.where(valid, focal, 0.0)

            out_ref[pl.ds(r, 1), :, sl] += focal

    if bn == 1:
        do_row(0)
    else:
        def body(r, carry):
            do_row(r)
            return carry
        jax.lax.fori_loop(0, bn, body, 0)


def focal_loss(inputs, targets, *, alpha=1.0, gamma=0.0, size_average=True,
               ignore_index=255):
    """inputs: (N, C, H, W) float logits; targets: (N, H, W) integer class ids."""
    N, C, H, W = inputs.shape
    S = H * W
    rows = N * S

    # View-only reshapes (no transpose, no pad copy): class axis stays on
    # sublanes, the flattened spatial axis sits on lanes (lane-dense).
    logits = inputs.reshape(N, C, S)
    tgt = targets.reshape(N, 1, S).astype(jnp.int32)

    itemsize = jnp.dtype(inputs.dtype).itemsize

    # ---- generation-aware VMEM budget ------------------------------------
    # 128-MiB-VMEM parts (v5e/v6e): ~8 MiB blocks, 64 MiB scoped limit.
    # 64-MiB-VMEM parts (v7x-class): ~6 MiB blocks, 48 MiB scoped limit.
    try:
        vmem_cap = int(pltpu.get_tpu_info().vmem_capacity_bytes)
    except Exception:
        vmem_cap = 0  # conservative fallback works on every generation
    big_vmem = vmem_cap >= 100 * 1024 * 1024
    if big_vmem:
        budget = 8 * 1024 * 1024
        vmem_limit = 64 * 1024 * 1024
    else:
        budget = 6 * 1024 * 1024
        vmem_limit = 48 * 1024 * 1024

    # ---- tile sizing -------------------------------------------------------
    # In-kernel lane sub-chunk: ~8 vregs per (1, C, SUB) f32 temporary
    # (sublane-padded), i.e. 1024 lanes for C<=8, 512 for C<=16, ...
    padded_c = -(-C // 8) * 8
    sub_units = max(1, 64 // padded_c)
    n_sub_max = 32                       # bounds static-loop code size

    s_units_full = pl.cdiv(S, 128)
    budget_units = max(1, budget // (C * 128 * itemsize))
    ts_units = max(1, min(s_units_full, n_sub_max * sub_units, budget_units))
    sub_units = min(sub_units, ts_units)
    ts_units = (ts_units // sub_units) * sub_units   # TS is a multiple of SUB
    TS = 128 * ts_units
    SUB = 128 * sub_units
    n_sub = ts_units // sub_units
    num_s = pl.cdiv(S, TS)

    # Batch rows per block: grow the block along N when S is small so each grid
    # step still moves a large slab (amortizes the ~0.35 us per-step overhead).
    row_bytes = (C * itemsize + 4) * TS              # logits + int32 targets
    Bn = int(max(1, min(N, budget // row_bytes)))
    NB = pl.cdiv(N, Bn)

    # Spatial split across TensorCores: only worthwhile on v7x-class parts
    # (2 TCs) and only when the batch-block axis cannot feed both cores.
    NP = 2 if ((not big_vmem) and NB == 1 and num_s >= 2) else 1
    SI = pl.cdiv(num_s, NP)

    mask_batch = (NB * Bn) != N
    mask_spatial = (S % TS != 0) or (NP * SI != num_s)

    kernel = functools.partial(
        _focal_loss_kernel,
        alpha=float(alpha), gamma=float(gamma), ignore_index=int(ignore_index),
        n_batch=N, spatial=S, bn=Bn, tile_s=TS, sub=SUB, n_sub=n_sub,
        s_inner=SI, mask_batch=mask_batch, mask_spatial=mask_spatial)

    def sblock(p, s):
        # Clamp so an over-counted last spatial chunk never DMAs out of bounds;
        # its duplicated tile is fully masked in-kernel via `tile_start`.
        return jnp.minimum(p * SI + s, num_s - 1)

    partial_sums = pl.pallas_call(
        kernel,
        out_shape=jax.ShapeDtypeStruct((NB * NP * Bn, 1, TS), jnp.float32),
        grid_spec=pltpu.PrefetchScalarGridSpec(
            num_scalar_prefetch=0,
            grid=(NB, NP, SI),
            in_specs=[
                pl.BlockSpec((Bn, C, TS), lambda nb, p, s: (nb, 0, sblock(p, s))),
                pl.BlockSpec((Bn, 1, TS), lambda nb, p, s: (nb, 0, sblock(p, s))),
            ],
            out_specs=pl.BlockSpec((Bn, 1, TS),
                                   lambda nb, p, s: (nb * NP + p, 0, 0)),
        ),
        compiler_params=pltpu.CompilerParams(
            dimension_semantics=("parallel", "parallel", "arbitrary"),
            vmem_limit_bytes=vmem_limit),
    )(logits, tgt)

    total = jnp.sum(partial_sums)   # tiny (NB*NP*Bn, 1, TS) reduce, outside
    if size_average:
        # PyTorch reference: F.cross_entropy(reduction='none') -> .mean()
        # divides by ALL N*H*W positions, including ignored ones (loss 0 there).
        return total / rows
    return total


def _reference(inputs, targets, *, alpha, gamma, size_average, ignore_index):
    """Pure-JAX reference matching the PyTorch FocalLoss forward."""
    x = inputs.astype(jnp.float32)                       # (N, C, H, W)
    t = targets.astype(jnp.int32)                        # (N, H, W)
    m = jnp.max(x, axis=1)
    lse = m + jnp.log(jnp.sum(jnp.exp(x - m[:, None]), axis=1))
    valid = t != ignore_index
    t_safe = jnp.where(valid, t, 0)
    tgt_logit = jnp.take_along_axis(x, t_safe[:, None], axis=1)[:, 0]
    ce = jnp.where(valid, lse - tgt_logit, 0.0)
    pt = jnp.exp(-ce)
    focal = alpha * (1.0 - pt) ** gamma * ce
    return focal.mean() if size_average else focal.sum()


if __name__ == "__main__":
    key = jax.random.PRNGKey(0)
    k1, k2, k3 = jax.random.split(key, 3)

    N, C, H, W = 2, 4, 16, 16
    inputs = jax.random.normal(k1, (N, C, H, W), dtype=jnp.float32)
    targets = jax.random.randint(k2, (N, H, W), 0, C, dtype=jnp.int32)
    # Sprinkle a few ignore_index labels.
    ignore_mask = jax.random.uniform(k3, (N, H, W)) < 0.1
    targets = jnp.where(ignore_mask, 255, targets)

    # Module defaults: alpha=1, gamma=0, size_average=True, ignore_index=255.
    loss = focal_loss(inputs, targets)
    jax.block_until_ready(loss)
    ref = _reference(inputs, targets, alpha=1.0, gamma=0.0,
                     size_average=True, ignore_index=255)
    assert jnp.allclose(loss, ref, rtol=1e-3, atol=1e-5), (loss, ref)

    # Non-trivial alpha / gamma / sum reduction.
    loss2 = focal_loss(inputs, targets, alpha=0.25, gamma=2.0,
                       size_average=False)
    jax.block_until_ready(loss2)
    ref2 = _reference(inputs, targets, alpha=0.25, gamma=2.0,
                      size_average=False, ignore_index=255)
    assert jnp.allclose(loss2, ref2, rtol=1e-3, atol=1e-4), (loss2, ref2)

    print("KERNEL_OK")
</pallas_src>

<mosaic_0001>
module attributes {stable_mosaic.version = 11 : i64} {
  func.func @_focal_loss_kernel(%arg0: i32, %arg1: i32, %arg2: i32, %arg3: memref<2x4x256xf32, #tpu.memory_space<vmem>>, %arg4: memref<2x1x256xi32, #tpu.memory_space<vmem>>, %arg5: memref<2x1x256xf32, #tpu.memory_space<vmem>>) attributes {dimension_semantics = [#tpu.dimension_semantics<parallel>, #tpu.dimension_semantics<parallel>, #tpu.dimension_semantics<arbitrary>], iteration_bounds = array<i64: 1, 1, 1>, scalar_prefetch = 0 : i64, scratch_operands = 0 : i64, tpu.core_type = #tpu.core_type<tc>, window_params = [{transform_indices = @transform_0, window_bounds = array<i64: 2, 4, 256>}, {transform_indices = @transform_1, window_bounds = array<i64: 2, 1, 256>}, {transform_indices = @transform_2, window_bounds = array<i64: 2, 1, 256>}]} {
    %c0_i32 = arith.constant 0 : i32
    %0 = arith.cmpi eq, %arg2, %c0_i32 : i32
    %1 = arith.extui %0 : i1 to i32
    %c0_i32_0 = arith.constant 0 : i32
    %2 = arith.cmpi ne, %1, %c0_i32_0 : i32
    scf.if %2 {
      %cst = arith.constant 0.000000e+00 : f32
      %4 = vector.broadcast %cst : f32 to vector<2x1x256xf32>
      %c0 = arith.constant 0 : index
      %c0_3 = arith.constant 0 : index
      %c0_4 = arith.constant 0 : index
      %5 = vector.load %arg5[%c0, %c0_3, %c0_4] : memref<2x1x256xf32, #tpu.memory_space<vmem>>, vector<2x1x256xf32>
      tpu.vector_store %arg5[%c0, %c0_3, %c0_4], %4 {strides = array<i32>} : memref<2x1x256xf32, #tpu.memory_space<vmem>>, vector<2x1x256xf32>,
    } else {
    }
    %c0_i32_1 = arith.constant 0 : i32
    %c2_i32 = arith.constant 2 : i32
    %3 = arith.addi %c0_i32_1, %c2_i32 : i32
    %c1_i32 = arith.constant 1 : i32
    scf.for %arg6 = %c0_i32_1 to %3 step %c1_i32  : i32 {
      %4 = arith.index_cast %arg6 : i32 to index
      %c0 = arith.constant 0 : index
      %c0_3 = arith.constant 0 : index
      %5 = vector.load %arg3[%4, %c0, %c0_3] : memref<2x4x256xf32, #tpu.memory_space<vmem>>, vector<1x4x256xf32>
      %6 = arith.index_cast %arg6 : i32 to index
      %c0_4 = arith.constant 0 : index
      %c0_5 = arith.constant 0 : index
      %7 = vector.load %arg4[%6, %c0_4, %c0_5] : memref<2x1x256xi32, #tpu.memory_space<vmem>>, vector<1x1x256xi32>
      %cst = arith.constant dense<0xFF800000> : vector<1x256xf32>
      %8 = vector.multi_reduction <maximumf>, %5, %cst [1] : vector<1x4x256xf32> to vector<1x256xf32>
      %9 = vector.shape_cast %8 : vector<1x256xf32> to vector<1x1x256xf32>
      %10 = vector.broadcast %9 : vector<1x1x256xf32> to vector<1x4x256xf32>
      %11 = arith.subf %5, %10 : vector<1x4x256xf32>
      %12 = math.exp %11 : vector<1x4x256xf32>
      %cst_6 = arith.constant dense<0.000000e+00> : vector<1x256xf32>
      %13 = vector.multi_reduction <add>, %12, %cst_6 [1] : vector<1x4x256xf32> to vector<1x256xf32>
      %14 = vector.shape_cast %13 : vector<1x256xf32> to vector<1x1x256xf32>
      %15 = math.log %14 : vector<1x1x256xf32>
      %16 = arith.addf %9, %15 : vector<1x1x256xf32>
      %17 = tpu.iota {dimensions = array<i32: 1>} : vector<1x4x256xi32>
      %18 = vector.broadcast %7 : vector<1x1x256xi32> to vector<1x4x256xi32>
      %19 = arith.cmpi eq, %17, %18 : vector<1x4x256xi32>
      %cst_7 = arith.constant 0.000000e+00 : f32
      %20 = vector.broadcast %cst_7 : f32 to vector<1x4x256xf32>
      %21 = arith.select %19, %5, %20 : vector<1x4x256xi1>, vector<1x4x256xf32>
      %cst_8 = arith.constant dense<0.000000e+00> : vector<1x256xf32>
      %22 = vector.multi_reduction <add>, %21, %cst_8 [1] : vector<1x4x256xf32> to vector<1x256xf32>
      %23 = vector.shape_cast %22 : vector<1x256xf32> to vector<1x1x256xf32>
      %24 = arith.subf %16, %23 : vector<1x1x256xf32>
      %c255_i32 = arith.constant 255 : i32
      %25 = vector.broadcast %c255_i32 : i32 to vector<1x1x256xi32>
      %26 = arith.cmpi ne, %7, %25 : vector<1x1x256xi32>
      %cst_9 = arith.constant 0.000000e+00 : f32
      %27 = vector.broadcast %cst_9 : f32 to vector<1x1x256xf32>
      %28 = arith.select %26, %24, %27 : vector<1x1x256xi1>, vector<1x1x256xf32>
      %29 = arith.index_cast %arg6 : i32 to index
      %c0_10 = arith.constant 0 : index
      %c0_11 = arith.constant 0 : index
      %30 = vector.load %arg5[%29, %c0_10, %c0_11] : memref<2x1x256xf32, #tpu.memory_space<vmem>>, vector<1x1x256xf32>
      %31 = arith.addf %30, %28 : vector<1x1x256xf32>
      %32 = arith.index_cast %arg6 : i32 to index
      %c0_12 = arith.constant 0 : index
      %c0_13 = arith.constant 0 : index
      %33 = vector.load %arg5[%32, %c0_12, %c0_13] : memref<2x1x256xf32, #tpu.memory_space<vmem>>, vector<1x1x256xf32>
      tpu.vector_store %arg5[%32, %c0_12, %c0_13], %31 {strides = array<i32>} : memref<2x1x256xf32, #tpu.memory_space<vmem>>, vector<1x1x256xf32>,
    }
    %c2_i32_2 = arith.constant 2 : i32
    return
  }
  func.func @transform_0(%arg0: i32, %arg1: i32, %arg2: i32) -> (i32, i32, i32) {
    %c1_i32 = arith.constant 1 : i32
    %0 = arith.muli %arg1, %c1_i32 : i32
    %1 = arith.addi %0, %arg2 : i32
    %c0_i32 = arith.constant 0 : i32
    %2 = arith.minsi %1, %c0_i32 : i32
    %c0_i32_0 = arith.constant 0 : i32
    %c0_i32_1 = arith.constant 0 : i32
    return %arg0, %c0_i32_0, %2 : i32, i32, i32
  }
  func.func @transform_1(%arg0: i32, %arg1: i32, %arg2: i32) -> (i32, i32, i32) {
    %c1_i32 = arith.constant 1 : i32
    %0 = arith.muli %arg1, %c1_i32 : i32
    %1 = arith.addi %0, %arg2 : i32
    %c0_i32 = arith.constant 0 : i32
    %2 = arith.minsi %1, %c0_i32 : i32
    %c0_i32_0 = arith.constant 0 : i32
    %c0_i32_1 = arith.constant 0 : i32
    return %arg0, %c0_i32_0, %2 : i32, i32, i32
  }
  func.func @transform_2(%arg0: i32, %arg1: i32, %arg2: i32) -> (i32, i32, i32) {
    %c1_i32 = arith.constant 1 : i32
    %0 = arith.muli %arg0, %c1_i32 : i32
    %1 = arith.addi %0, %arg1 : i32
    %c0_i32 = arith.constant 0 : i32
    %c0_i32_0 = arith.constant 0 : i32
    %c0_i32_1 = arith.constant 0 : i32
    return %1, %c0_i32, %c0_i32_0 : i32, i32, i32
  }
}

</mosaic_0001>

<llo_original>
// kernel: tpu_custom_call.1
$region0: #{tpu_custom_call.1}
  #allocation0 [shape = 'u32[]', space=smem, size = 0x4, offset = 0x4, fixed_abs, tag = 'smem constant byte address 0x4 - core index']
  #allocation1 [shape = 'u32[144,128]{1,0:T(1,128)}', space=vmem, size = 0x12000, scoped, tag = 'internal scratch']
  %s0 = inlined_call_operand.hbm [shape: f32[2,4,256], index: 0, kind: input, shape index: {}]
  %s1 = inlined_call_operand.hbm [shape: s32[2,1,256], index: 1, kind: input, shape index: {}]
  %s2 = inlined_call_operand.hbm [shape: f32[2,1,256], index: 2, kind: output, shape index: {}]
  %s3 = sld [smem:[#allocation0]]
  $region37: #{tpu_custom_call.1} parent=0
    _
  %s5 = ssub.s32 1, %s3
  %s6 = scalar_select 0, %s5, %s3
  $region1: #{tpu_custom_call.1} parent=0
    #allocation2 [shape = 'u8[8192]{0}', space=vmem, size = 0x2000, scoped, tag = 'input window, operand 0, single buffered']
    #allocation3 [shape = 's32[1]{0}', space=sflag, size = 0x4, scoped, tag = 'scoped memory for tpu_custom_call.1']
    #allocation4 [shape = 's32[1]{0}', space=sflag, size = 0x4, scoped, tag = 'scoped memory for tpu_custom_call.1']
    #allocation5 [shape = 'u8[2048]{0}', space=vmem, size = 0x800, scoped, tag = 'input window, operand 1, single buffered']
    #allocation6 [shape = 's32[1]{0}', space=sflag, size = 0x4, scoped, tag = 'scoped memory for tpu_custom_call.1']
    #allocation7 [shape = 'u8[2048]{0}', space=vmem, size = 0x800, scoped, tag = 'output window, operand 0, single buffered']
    %7 = vsyncpa [#allocation3], 0
    %8 = vsyncpa [#allocation6], 0
    %9 = vsyncpa [#allocation4], 0
    // Predicated region
    $region2: #{tpu_custom_call.1} parent=1 // pred_check
      _
    $region3: #{tpu_custom_call.1} parent=1 // pred_check_branch
      %11 = sbr.rel (0) target = $region5
    $region4: #{tpu_custom_call.1} parent=1 // pred_region
      %s12 = sadd.s32 0, 0
      %p13 = scmp.lt.s32.totalorder %s12, 0
      %s14 = scalar_select %p13, %s12, 0
      %s15 = smul.u32 2, %s14
      %s17 = ssub.s32 256, 256
      %18 = vsyncadd [#allocation3], %s17
      %s19 = smul.addr %s15, 64
      %s20 = scalar_lea.hbm %s0, %s19
      %s21 = sshll.u32 [#allocation2], 4
      %s22 = int_to_ptr.vmem [resolvable:$true] %s21
      %27 = dma.hbm_to_vmem [thread:$0]  %s20, 256, %s22, [#allocation3], 128, 128, 8
    $region5: #{tpu_custom_call.1} parent=1 // pred_fallthru
      _
    // Predicated region
    $region6: #{tpu_custom_call.1} parent=1 // pred_check
      _
    $region7: #{tpu_custom_call.1} parent=1 // pred_check_branch
      %29 = sbr.rel (0) target = $region9
    $region8: #{tpu_custom_call.1} parent=1 // pred_region
      %s30 = sadd.s32 0, 0
      %p31 = scmp.lt.s32.totalorder %s30, 0
      %s32 = scalar_select %p31, %s30, 0
      %s33 = smul.u32 2, %s32
      %s35 = ssub.s32 64, 64
      %36 = vsyncadd [#allocation6], %s35
      %s37 = smul.addr %s33, 16
      %s38 = scalar_lea.hbm %s1, %s37
      %s39 = sshll.u32 [#allocation5], 4
      %s40 = int_to_ptr.vmem [resolvable:$true] %s39
      %45 = dma.hbm_to_vmem [thread:$0]  %s38, 64, %s40, [#allocation6], 32, 32, 2
    $region9: #{tpu_custom_call.1} parent=1 // pred_fallthru
      _
    // Predicated region
    $region10: #{tpu_custom_call.1} parent=1 // pred_check
      _
    $region11: #{tpu_custom_call.1} parent=1 // pred_check_branch
      %47 = sbr.rel (0) target = $region13
    $region12: #{tpu_custom_call.1} parent=1 // pred_region
      %48 = dma.done [#allocation3], 256
    $region13: #{tpu_custom_call.1} parent=1 // pred_fallthru
      _
    // Predicated region
    $region14: #{tpu_custom_call.1} parent=1 // pred_check
      _
    $region15: #{tpu_custom_call.1} parent=1 // pred_check_branch
      %50 = sbr.rel (0) target = $region17
    $region16: #{tpu_custom_call.1} parent=1 // pred_region
      %51 = dma.done [#allocation6], 64
    $region17: #{tpu_custom_call.1} parent=1 // pred_fallthru
      _
    %s52 = sadd.s32 0, 0
    %p53 = scmp.lt.s32.totalorder %s52, 0
    %s54 = scalar_select %p53, %s52, 0
    %s55 = smul.u32 2, %s54
    %s56 = sadd.s32 0, 0
    %p57 = scmp.lt.s32.totalorder %s56, 0
    %s58 = scalar_select %p57, %s56, 0
    %s59 = smul.u32 2, %s58
    %s60 = sadd.s32 0, 0
    %s61 = smul.u32 2, %s60
    %p62 = scmp.eq.s32.totalorder 0, 0
    // Predicated region
    $region18: #{tpu_custom_call.1} parent=1 // pred_check
      %p63 = pneg %p62
    $region19: #{tpu_custom_call.1} parent=1 // pred_check_branch
      %65 = sbr.rel (%p63) target = $region21
    $region20: #{tpu_custom_call.1} parent=1 // pred_region
      %v66 = vlaneseq
      %vm67 = vcmp.ge.s32.totalorder %v66, 0
      %vm68 = vcmp.lt.s32.totalorder %v66, 256
      %vm69 = vmand %vm67, %vm68
      %70 = vst.msk [vmem:[#allocation7] sm:$0x3] %vm69, 0.0
      %71 = vst.msk [vmem:[#allocation7 + $0x2] sm:$0x3] %vm69, 0.0
    $region21: #{tpu_custom_call.1} parent=1 // pred_fallthru
      _
    loop: start=0, step=1, limit=2
    $region22: #{tpu_custom_call.1} parent=1 // loop_pre_header
      _
    $region23: #{tpu_custom_call.1} parent=1 // loop_header
      %s73 = sphi 0, %s77
      %p74 = scmp.ge.s32.totalorder %s73, 2
    $region24: #{tpu_custom_call.1} parent=1 // loop_header_branch
      %76 = sbr.rel (%p74) target = $region28
    $region25: #{tpu_custom_call.1} parent=1 // loop_body
      %s78 = smul.u32 %s73, 2
      %s79 = smul.addr %s78, 4
      %s80 = scalar_lea.vmem [#allocation2], %s79
      %v81 = vld [vmem:[%s80] sm:$0xff]
      %s82 = scalar_lea.vmem [#allocation5], %s78
      %v83 = vld [vmem:[%s82] sm:$0x3]
      %v85 = vcombine.high %v81, %v81
      %vm87 = vcmask 1043456
      %v88 = vsel %vm87, %v81, -inf
      %v89 = vrot.slane %v88, 4
      %v90 = vmax.f32 %v88, %v89
      %v91 = vrot.slane %v90, 2
      %v92 = vmax.f32 %v90, %v91
      %v93 = vrot.slane %v92, 1
      %v94 = vmax.f32 %v92, %v93
      %v95 = vsel %vm87, %v85, -inf
      %v96 = vrot.slane %v95, 4
      %v97 = vmax.f32 %v95, %v96
      %v98 = vrot.slane %v97, 2
      %v99 = vmax.f32 %v97, %v98
      %v100 = vrot.slane %v99, 1
      %v101 = vmax.f32 %v99, %v100
      %v104 = vcombine.low %v94, %v101
      %v106 = vsub.f32 %v81, %v104
      %v107 = vmul.f32 %v106, 1.442695
      %v108 = vpow.pop %v107
      %v110 = vcombine.high %v108, %v108
      %v112 = vsel %vm87, %v108, 0.0
      %v113 = vrot.slane %v112, 4
      %v114 = vadd.f32 %v112, %v113
      %v115 = vrot.slane %v114, 2
      %v116 = vadd.f32 %v114, %v115
      %v117 = vrot.slane %v116, 1
      %v118 = vadd.f32 %v116, %v117
      %v119 = vsel %vm87, %v110, 0.0
      %v120 = vrot.slane %v119, 4
      %v121 = vadd.f32 %v119, %v120
      %v122 = vrot.slane %v121, 2
      %v123 = vadd.f32 %v121, %v122
      %v124 = vrot.slane %v123, 1
      %v125 = vadd.f32 %v123, %v124
      %v126 = vlog2.pop %v118
      %v127 = vmul.f32 %v126, 0.6931472
      %v128 = vlog2.pop %v125
      %v129 = vmul.f32 %v128, 0.6931472
      %v130 = vadd.f32 %v94, %v127
      %v131 = vadd.f32 %v101, %v129
      %v132 = vlaneseq
      %v133 = vshrl.u32 %v132, 7
      %v134 = vlaneseq
      %v135 = vshrl.u32 %v134, 7
      %v136 = vsub.s32 0, %v135
      %v137 = vrot.slane %v83, %v136
      %v138 = vlaneseq
      %v139 = vshrl.u32 %v138, 7
      %v140 = vsub.s32 1, %v139
      %v141 = vrot.slane %v83, %v140
      %vm142 = vcmp.eq.s32.totalorder %v133, %v137
      %vm143 = vcmp.eq.s32.totalorder %v133, %v141
      %v144 = vsel %vm142, %v81, 0.0
      %v145 = vsel %vm143, %v85, 0.0
      %v146 = vsel %vm87, %v144, 0.0
      %v147 = vrot.slane %v146, 4
      %v148 = vadd.f32 %v146, %v147
      %v149 = vrot.slane %v148, 2
      %v150 = vadd.f32 %v148, %v149
      %v151 = vrot.slane %v150, 1
      %v152 = vadd.f32 %v150, %v151
      %v153 = vsel %vm87, %v145, 0.0
      %v154 = vrot.slane %v153, 4
      %v155 = vadd.f32 %v153, %v154
      %v156 = vrot.slane %v155, 2
      %v157 = vadd.f32 %v155, %v156
      %v158 = vrot.slane %v157, 1
      %v159 = vadd.f32 %v157, %v158
      %v160 = vsub.f32 %v130, %v152
      %v161 = vsub.f32 %v131, %v159
      %vm162 = vcmp.ne.s32.totalorder %v83, 255
      %v165 = vcombine.low %v160, %v161
      %v167 = vunpack.c.l.s4 1966171168
      %v168 = vunpack.c.0.s8 %v167
      %v169 = vlaneseq
      %v170 = vshrl.u32 %v169, 7
      %v171 = vsub.s32 %v168, %v170
      %v172 = vrot.slane %v165, %v171
      %v174 = vunpack.c.l.s4 1966171168
      %v175 = vunpack.c.0.s8 %v174
      %v176 = vlaneseq
      %v177 = vshrl.u32 %v176, 7
      %v178 = vsub.s32 %v175, %v177
      %v179 = vrot.slane %v172, %v178
      %v181 = vsel %vm162, %v179, 0.0
      %s182 = scalar_lea.vmem [#allocation7], %s78
      %v183 = vld [vmem:[%s182] sm:$0x3]
      %v184 = vadd.f32 %v183, %v181
      %v185 = vlaneseq
      %vm186 = vcmp.ge.s32.totalorder %v185, 0
      %vm187 = vcmp.lt.s32.totalorder %v185, 256
      %vm188 = vmand %vm186, %vm187
      %189 = vst.msk [vmem:[%s182] sm:$0x3] %vm188, %v184
    $region26: #{tpu_custom_call.1} parent=1 // loop_footer
      %s77 = sadd.s32 1, %s73
    $region27: #{tpu_custom_call.1} parent=1 // loop_footer_branch
      %72 = sbr.rel target = $region23
    $region28: #{tpu_custom_call.1} parent=1 // loop_exit
      _
    // Predicated region
    $region29: #{tpu_custom_call.1} parent=1 // pred_check
      _
    $region30: #{tpu_custom_call.1} parent=1 // pred_check_branch
      %191 = sbr.rel (0) target = $region32
    $region31: #{tpu_custom_call.1} parent=1 // pred_region
      %s192 = sadd.s32 0, 0
      %s193 = smul.u32 2, %s192
      %s195 = ssub.s32 64, 64
      %196 = vsyncadd [#allocation4], %s195
      %s197 = smul.addr %s193, 2
      %s198 = smul.addr %s197, 16
      %s199 = scalar_lea.hbm %s2, %s198
      %s200 = sshll.u32 [#allocation7], 4
      %s201 = int_to_ptr.vmem [resolvable:$true] %s200
      %206 = dma.vmem_to_hbm [thread:$0]  %s201, 64, %s199, [#allocation4], 32, 32, 2
    $region32: #{tpu_custom_call.1} parent=1 // pred_fallthru
      _
    // Predicated region
    $region33: #{tpu_custom_call.1} parent=1 // pred_check
      _
    $region34: #{tpu_custom_call.1} parent=1 // pred_check_branch
      %208 = sbr.rel (0) target = $region36
    $region35: #{tpu_custom_call.1} parent=1 // pred_region
      %209 = dma.done [#allocation4], 64
    $region36: #{tpu_custom_call.1} parent=1 // pred_fallthru
      _
    %210 = vsyncpa [#allocation3], 1
    %211 = vsyncpa [#allocation6], 1
    %212 = vsyncpa [#allocation4], 1

</llo_original>
